<compile_context>
chip_gen: v6e
topology: v6e:2x2x1
jax: 0.10.0
libtpu: 0.0.40
codegen_flags: <defaults>
</compile_context>

<pallas_src>
import functools

import jax
import jax.numpy as jnp
from jax.experimental import pallas as pl
from jax.experimental.pallas import tpu as pltpu


# ----------------------------- in-kernel helpers -----------------------------

def _layer_norm(x, gamma, beta, eps=1e-5):
    mu = jnp.mean(x, axis=-1, keepdims=True)
    var = jnp.mean((x - mu) ** 2, axis=-1, keepdims=True)
    return (x - mu) * jax.lax.rsqrt(var + eps) * gamma + beta


def _gelu_exact(x):
    # F.gelu default is the exact (erf) formulation.
    return 0.5 * x * (1.0 + jax.lax.erf(x * (1.0 / jnp.sqrt(2.0).astype(x.dtype))))


# ------------------------------ Pallas kernels -------------------------------

def embed_ln_kernel(tok_ref, seg_ref, pos_ref, g_ref, b_ref, o_ref):
    # tok/seg blocks: (1, S, D); pos: (S, D) shared across batch; g/b: (1, D)
    x = tok_ref[0] + seg_ref[0] + pos_ref[...]
    o_ref[0] = _layer_norm(x, g_ref[...], b_ref[...])


def encoder_stack_kernel(x_ref, bias_ref,
                         wqkv_ref, bqkv_ref, wo_ref, bo_ref,
                         g1_ref, be1_ref,
                         w1_ref, b1_ref, w2_ref, b2_ref,
                         o_ref, *, n_heads, d_k):
    # grid = (B, L): axis 0 = batch ("parallel"), axis 1 = layer ("arbitrary").
    # The activation for one batch element is carried across the layer axis in
    # the VMEM-resident output block (its block index only depends on b).
    l = pl.program_id(1)

    @pl.when(l == 0)
    def _():
        o_ref[0] = x_ref[0]

    x = o_ref[0]                                      # (S, D) f32, layer l input
    S, _ = x.shape
    HK = n_heads * d_k
    x_bf = x.astype(jnp.bfloat16)

    # ---- fused QKV projection: one (S,D)@(D,3*HK) MXU pass, f32 accumulation ----
    qkv = jnp.dot(x_bf, wqkv_ref[0], preferred_element_type=jnp.float32) + bqkv_ref[0]
    q3 = qkv[:, :HK].reshape(S, n_heads, d_k).astype(jnp.bfloat16)
    k3 = qkv[:, HK:2 * HK].reshape(S, n_heads, d_k).astype(jnp.bfloat16)
    v3 = qkv[:, 2 * HK:].reshape(S, n_heads, d_k).astype(jnp.bfloat16)

    # ---- scaled dot-product attention, batched over heads ----
    inv_scale = jnp.float32(1.0 / (d_k ** 0.5))
    scores = jnp.einsum('qhd,khd->hqk', q3, k3,
                        preferred_element_type=jnp.float32) * inv_scale
    # additive padding bias: -1e9 on padded key positions, (1, 1, S) broadcast
    # over all heads/queries (equivalent to masked_fill(-1e9) post-softmax).
    scores = scores + bias_ref[...]

    m = jnp.max(scores, axis=-1, keepdims=True)
    e = jnp.exp(scores - m)
    attn = e * pl.reciprocal(jnp.sum(e, axis=-1, keepdims=True), approx=True)

    ctx = jnp.einsum('hqk,khd->qhd', attn.astype(jnp.bfloat16), v3,
                     preferred_element_type=jnp.float32)
    ctx = ctx.reshape(S, HK)                          # concat heads

    # ---- output projection + residual + LayerNorm ----
    attn_out = jnp.dot(ctx.astype(jnp.bfloat16), wo_ref[0],
                       preferred_element_type=jnp.float32) + bo_ref[0]
    res = _layer_norm(attn_out + x, g1_ref[0], be1_ref[0])

    # ---- position-wise FFN (reference EncoderLayer has no residual/LN here) ----
    h1 = _gelu_exact(jnp.dot(res.astype(jnp.bfloat16), w1_ref[0],
                             preferred_element_type=jnp.float32) + b1_ref[0])
    y = jnp.dot(h1.astype(jnp.bfloat16), w2_ref[0],
                preferred_element_type=jnp.float32) + b2_ref[0]

    # carry for layer l+1; written back to HBM when the batch block changes.
    o_ref[0] = y


# ------------------------------ kernel wrappers -------------------------------

def _full_spec(shape):
    n = len(shape)
    return pl.BlockSpec(shape, lambda b, _n=n: (0,) * _n)


def embed_layernorm(tok, seg, pos, gamma, beta):
    B, S, D = tok.shape
    return pl.pallas_call(
        embed_ln_kernel,
        out_shape=jax.ShapeDtypeStruct((B, S, D), jnp.float32),
        grid=(B,),
        in_specs=[
            pl.BlockSpec((1, S, D), lambda b: (b, 0, 0)),
            pl.BlockSpec((1, S, D), lambda b: (b, 0, 0)),
            _full_spec((S, D)),          # pos: shared across batch, no B-replication
            _full_spec((1, D)),
            _full_spec((1, D)),
        ],
        out_specs=pl.BlockSpec((1, S, D), lambda b: (b, 0, 0)),
        compiler_params=pltpu.CompilerParams(dimension_semantics=("parallel",)),
    )(tok, seg, pos, gamma, beta)


def _encoder_vmem_estimate(S, D, HK, d_ff, n_heads):
    # Double-buffered bf16 weight blocks + f32 bias/LN blocks (pipelined over
    # the layer axis), f32 activation / mask / output blocks, plus f32
    # intermediates (qkv, scores + exp copy, ctx, FFN hidden, misc).
    w = 2 * 2 * (3 * D * HK + HK * D + D * d_ff + d_ff * D)
    vec = 2 * 4 * (3 * HK + 4 * D + d_ff)
    io = 2 * 4 * (2 * S * D + S)
    scratch = 4 * (2 * S * 3 * HK + 3 * n_heads * S * S
                   + 2 * S * HK + 2 * S * d_ff + 4 * S * D)
    return w + vec + io + scratch


def _vmem_limit_bytes(est_bytes):
    # Generation-aware cap: ~85% of physical VMEM (~108 MiB on v5e/v6e with
    # 128 MiB, ~54 MiB on v7x with 64 MiB), never request less than 32 MiB.
    try:
        cap = int(pltpu.get_tpu_info().vmem_capacity_bytes)
    except Exception:
        cap = 64 * 1024 * 1024
    return int(min(int(0.85 * cap), max(4 * est_bytes, 32 * 1024 * 1024)))


def encoder_stack(x, pad_bias, lw, *, n_heads, d_k):
    """Runs all encoder layers in one pallas_call.

    x: (B, S, D) f32; pad_bias: (B, 1, S) f32 additive mask; lw: dict of
    layer-stacked weights, each with a leading L dimension.
    """
    B, S, D = x.shape
    L = lw["wqkv"].shape[0]
    HK = n_heads * d_k
    d_ff = lw["w1"].shape[-1]
    kernel = functools.partial(encoder_stack_kernel, n_heads=n_heads, d_k=d_k)

    def wspec(arr):
        nz = arr.ndim - 1
        return pl.BlockSpec((1,) + arr.shape[1:],
                            lambda b, l, _nz=nz: (l,) + (0,) * _nz)

    est = _encoder_vmem_estimate(S, D, HK, d_ff, n_heads)

    return pl.pallas_call(
        kernel,
        out_shape=jax.ShapeDtypeStruct((B, S, D), jnp.float32),
        grid=(B, L),
        in_specs=[
            pl.BlockSpec((1, S, D), lambda b, l: (b, 0, 0)),   # layer-0 input
            pl.BlockSpec((1, 1, S), lambda b, l: (b, 0, 0)),   # additive pad bias
            wspec(lw["wqkv"]), wspec(lw["bqkv"]),
            wspec(lw["wo"]), wspec(lw["bo"]),
            wspec(lw["g1"]), wspec(lw["be1"]),
            wspec(lw["w1"]), wspec(lw["b1"]),
            wspec(lw["w2"]), wspec(lw["b2"]),
        ],
        out_specs=pl.BlockSpec((1, S, D), lambda b, l: (b, 0, 0)),
        compiler_params=pltpu.CompilerParams(
            dimension_semantics=("parallel", "arbitrary"),
            vmem_limit_bytes=_vmem_limit_bytes(est)),
    )(x, pad_bias,
      lw["wqkv"], lw["bqkv"], lw["wo"], lw["bo"],
      lw["g1"], lw["be1"],
      lw["w1"], lw["b1"], lw["w2"], lw["b2"])


# ----------------------------- parameter creation -----------------------------

def init_params(key, n_layers, n_heads, d_model, d_ff, d_k,
                n_segments, vocab_size, max_len):
    HK = n_heads * d_k
    keys = iter(jax.random.split(key, 8 + 4 * n_layers))

    def lin(k, din, dout, scale=0.02, dtype=jnp.float32):
        return (scale * jax.random.normal(k, (din, dout))).astype(dtype)

    p = {
        "tok_embed": (0.02 * jax.random.normal(next(keys), (vocab_size, d_model))).astype(jnp.float32),
        "pos_embed": (0.02 * jax.random.normal(next(keys), (max_len, d_model))).astype(jnp.float32),
        "seg_embed": (0.02 * jax.random.normal(next(keys), (n_segments, d_model))).astype(jnp.float32),
        "emb_ln_g": jnp.ones((1, d_model), jnp.float32),
        "emb_ln_b": jnp.zeros((1, d_model), jnp.float32),
        "fc_w": lin(next(keys), d_model, d_model),
        "fc_b": jnp.zeros((d_model,), jnp.float32),
        "cls_w": lin(next(keys), d_model, 2),
        "cls_b": jnp.zeros((2,), jnp.float32),
        "lin_w": lin(next(keys), d_model, d_model),
        "lin_b": jnp.zeros((d_model,), jnp.float32),
        "norm_g": jnp.ones((d_model,), jnp.float32),
        "norm_b": jnp.zeros((d_model,), jnp.float32),
        "decoder_bias": jnp.zeros((vocab_size,), jnp.float32),
    }

    # NOTE: in the reference PyTorch code the attention output projection and
    # its LayerNorm are freshly constructed inside forward() (random init each
    # call); here they are deterministic per-layer parameters.
    bf16 = jnp.bfloat16
    wqkv, wo, w1, w2 = [], [], [], []
    for _ in range(n_layers):
        wqkv.append(lin(next(keys), d_model, 3 * HK, dtype=bf16))  # fused Q|K|V
        wo.append(lin(next(keys), HK, d_model, dtype=bf16))
        w1.append(lin(next(keys), d_model, d_ff, dtype=bf16))
        w2.append(lin(next(keys), d_ff, d_model, dtype=bf16))

    p["layers"] = {
        "wqkv": jnp.stack(wqkv),
        "bqkv": jnp.zeros((n_layers, 1, 3 * HK), jnp.float32),
        "wo": jnp.stack(wo),
        "bo": jnp.zeros((n_layers, 1, d_model), jnp.float32),
        "g1": jnp.ones((n_layers, 1, d_model), jnp.float32),
        "be1": jnp.zeros((n_layers, 1, d_model), jnp.float32),
        "w1": jnp.stack(w1),
        "b1": jnp.zeros((n_layers, 1, d_ff), jnp.float32),
        "w2": jnp.stack(w2),
        "b2": jnp.zeros((n_layers, 1, d_model), jnp.float32),
    }
    return p


# -------------------------------- BERT forward --------------------------------

def bert_forward(params, input_ids, segment_ids=None, masked_pos=None,
                 attention_mask=None, *, n_heads, d_k):
    # TODO(synk): the reference raises ValueError on out-of-range token / segment
    # ids; runtime index-range checks are not done here.
    B, S = input_ids.shape
    if segment_ids is None:
        segment_ids = jnp.zeros_like(input_ids)
    if attention_mask is None:
        attention_mask = (input_ids != 0).astype(jnp.float32)

    # Embedding gathers (glue) + sum/LayerNorm (Pallas).
    tok = params["tok_embed"][input_ids]
    seg = params["seg_embed"][segment_ids]
    pos = params["pos_embed"][:S]                       # (S, D), shared over batch
    output = embed_layernorm(tok, seg, pos, params["emb_ln_g"], params["emb_ln_b"])

    # get_attn_pad_mask as an additive bias: -1e9 where a key position is
    # padding, 0 elsewhere; (B, 1, S), broadcast to (H, S, S) inside the kernel.
    pad_bias = (jnp.float32(-1e9)
                * (1.0 - attention_mask.astype(jnp.float32))).reshape(B, 1, S)

    # All encoder layers in one pallas_call (layer axis = inner grid dim).
    output = encoder_stack(output, pad_bias, params["layers"],
                           n_heads=n_heads, d_k=d_k)

    # Pooler + NSP classifier (tiny; plain JAX glue).
    h_pooled = jnp.tanh(output[:, 0] @ params["fc_w"] + params["fc_b"])
    logits_nsp = h_pooled @ params["cls_w"] + params["cls_b"]

    logits_lm = None
    if masked_pos is not None:
        h_masked = jnp.take_along_axis(output, masked_pos[:, :, None], axis=1)
        h = h_masked @ params["lin_w"] + params["lin_b"]
        h = jax.nn.gelu(h, approximate=False)
        mu = h.mean(-1, keepdims=True)
        var = ((h - mu) ** 2).mean(-1, keepdims=True)
        h = (h - mu) / jnp.sqrt(var + 1e-5) * params["norm_g"] + params["norm_b"]
        # decoder weight tied to token embedding
        logits_lm = h @ params["tok_embed"].T + params["decoder_bias"]

    return output, logits_lm, logits_nsp


# ------------------------------------ main ------------------------------------

if __name__ == "__main__":
    n_layers, n_heads, d_model, d_ff, d_k = 2, 4, 32, 64, 8
    n_segments, vocab_size, max_len = 2, 64, 16
    B, S, n_masked = 2, 8, 3

    key = jax.random.PRNGKey(0)
    pkey, ikey, skey, mkey = jax.random.split(key, 4)

    params = init_params(pkey, n_layers, n_heads, d_model, d_ff, d_k,
                         n_segments, vocab_size, max_len)

    input_ids = jax.random.randint(ikey, (B, S), 1, vocab_size, dtype=jnp.int32)
    input_ids = input_ids.at[:, -2:].set(0)  # trailing padding tokens
    segment_ids = jax.random.randint(skey, (B, S), 0, n_segments, dtype=jnp.int32)
    masked_pos = jax.random.randint(mkey, (B, n_masked), 0, S, dtype=jnp.int32)

    output, logits_lm, logits_nsp = bert_forward(
        params, input_ids, segment_ids, masked_pos, n_heads=n_heads, d_k=d_k)

    jax.block_until_ready((output, logits_lm, logits_nsp))
    assert output.shape == (B, S, d_model)
    assert logits_lm.shape == (B, n_masked, vocab_size)
    assert logits_nsp.shape == (B, 2)
    print("KERNEL_OK")
</pallas_src>

<mosaic_0001>
module attributes {stable_mosaic.version = 11 : i64} {
  func.func @embed_ln_kernel(%arg0: i32, %arg1: memref<1x8x32xf32, #tpu.memory_space<vmem>>, %arg2: memref<1x8x32xf32, #tpu.memory_space<vmem>>, %arg3: memref<8x32xf32, #tpu.memory_space<vmem>>, %arg4: memref<1x32xf32, #tpu.memory_space<vmem>>, %arg5: memref<1x32xf32, #tpu.memory_space<vmem>>, %arg6: memref<1x8x32xf32, #tpu.memory_space<vmem>>) attributes {dimension_semantics = [#tpu.dimension_semantics<parallel>], iteration_bounds = array<i64: 2>, scalar_prefetch = 0 : i64, scratch_operands = 0 : i64, tpu.core_type = #tpu.core_type<tc>, window_params = [{transform_indices = @transform_0, window_bounds = array<i64: 1, 8, 32>}, {transform_indices = @transform_1, window_bounds = array<i64: 1, 8, 32>}, {pipeline_mode = #tpu.pipeline_mode<synchronous>, transform_indices = @transform_2, window_bounds = array<i64: 8, 32>}, {pipeline_mode = #tpu.pipeline_mode<synchronous>, transform_indices = @transform_3, window_bounds = array<i64: 1, 32>}, {pipeline_mode = #tpu.pipeline_mode<synchronous>, transform_indices = @transform_4, window_bounds = array<i64: 1, 32>}, {transform_indices = @transform_5, window_bounds = array<i64: 1, 8, 32>}]} {
    %c0 = arith.constant 0 : index
    %c0_0 = arith.constant 0 : index
    %c0_1 = arith.constant 0 : index
    %0 = vector.load %arg1[%c0, %c0_0, %c0_1] : memref<1x8x32xf32, #tpu.memory_space<vmem>>, vector<1x8x32xf32>
    %1 = vector.shape_cast %0 : vector<1x8x32xf32> to vector<8x32xf32>
    %c0_2 = arith.constant 0 : index
    %c0_3 = arith.constant 0 : index
    %c0_4 = arith.constant 0 : index
    %2 = vector.load %arg2[%c0_2, %c0_3, %c0_4] : memref<1x8x32xf32, #tpu.memory_space<vmem>>, vector<1x8x32xf32>
    %3 = vector.shape_cast %2 : vector<1x8x32xf32> to vector<8x32xf32>
    %4 = arith.addf %1, %3 : vector<8x32xf32>
    %c0_5 = arith.constant 0 : index
    %c0_6 = arith.constant 0 : index
    %5 = vector.load %arg3[%c0_5, %c0_6] : memref<8x32xf32, #tpu.memory_space<vmem>>, vector<8x32xf32>
    %6 = arith.addf %4, %5 : vector<8x32xf32>
    %c0_7 = arith.constant 0 : index
    %c0_8 = arith.constant 0 : index
    %7 = vector.load %arg4[%c0_7, %c0_8] : memref<1x32xf32, #tpu.memory_space<vmem>>, vector<1x32xf32>
    %c0_9 = arith.constant 0 : index
    %c0_10 = arith.constant 0 : index
    %8 = vector.load %arg5[%c0_9, %c0_10] : memref<1x32xf32, #tpu.memory_space<vmem>>, vector<1x32xf32>
    %cst = arith.constant dense<0.000000e+00> : vector<8xf32>
    %9 = vector.multi_reduction <add>, %6, %cst [1] : vector<8x32xf32> to vector<8xf32>
    %10 = vector.shape_cast %9 : vector<8xf32> to vector<8x1xf32>
    %cst_11 = arith.constant 3.200000e+01 : f32
    %11 = vector.broadcast %cst_11 : f32 to vector<8x1xf32>
    %12 = arith.divf %10, %11 : vector<8x1xf32>
    %13 = vector.broadcast %12 : vector<8x1xf32> to vector<8x32xf32>
    %14 = arith.subf %6, %13 : vector<8x32xf32>
    %15 = arith.mulf %14, %14 : vector<8x32xf32>
    %cst_12 = arith.constant dense<0.000000e+00> : vector<8xf32>
    %16 = vector.multi_reduction <add>, %15, %cst_12 [1] : vector<8x32xf32> to vector<8xf32>
    %17 = vector.shape_cast %16 : vector<8xf32> to vector<8x1xf32>
    %cst_13 = arith.constant 3.200000e+01 : f32
    %18 = vector.broadcast %cst_13 : f32 to vector<8x1xf32>
    %19 = arith.divf %17, %18 : vector<8x1xf32>
    %20 = vector.broadcast %12 : vector<8x1xf32> to vector<8x32xf32>
    %21 = arith.subf %6, %20 : vector<8x32xf32>
    %cst_14 = arith.constant 9.99999974E-6 : f32
    %22 = vector.broadcast %cst_14 : f32 to vector<8x1xf32>
    %23 = arith.addf %19, %22 : vector<8x1xf32>
    %24 = math.rsqrt %23 : vector<8x1xf32>
    %25 = vector.broadcast %24 : vector<8x1xf32> to vector<8x32xf32>
    %26 = arith.mulf %21, %25 : vector<8x32xf32>
    %27 = vector.broadcast %7 : vector<1x32xf32> to vector<8x32xf32>
    %28 = arith.mulf %26, %27 : vector<8x32xf32>
    %29 = vector.broadcast %8 : vector<1x32xf32> to vector<8x32xf32>
    %30 = arith.addf %28, %29 : vector<8x32xf32>
    %c0_15 = arith.constant 0 : index
    %c0_16 = arith.constant 0 : index
    %c0_17 = arith.constant 0 : index
    %31 = vector.load %arg6[%c0_15, %c0_16, %c0_17] : memref<1x8x32xf32, #tpu.memory_space<vmem>>, vector<1x8x32xf32>
    %32 = vector.shape_cast %31 : vector<1x8x32xf32> to vector<8x32xf32>
    %33 = vector.shape_cast %30 : vector<8x32xf32> to vector<1x8x32xf32>
    tpu.vector_store %arg6[%c0_15, %c0_16, %c0_17], %33 {strides = array<i32>} : memref<1x8x32xf32, #tpu.memory_space<vmem>>, vector<1x8x32xf32>,
    return
  }
  func.func @transform_0(%arg0: i32) -> (i32, i32, i32) {
    %c0_i32 = arith.constant 0 : i32
    %c0_i32_0 = arith.constant 0 : i32
    %c0_i32_1 = arith.constant 0 : i32
    return %arg0, %c0_i32, %c0_i32_0 : i32, i32, i32
  }
  func.func @transform_1(%arg0: i32) -> (i32, i32, i32) {
    %c0_i32 = arith.constant 0 : i32
    %c0_i32_0 = arith.constant 0 : i32
    %c0_i32_1 = arith.constant 0 : i32
    return %arg0, %c0_i32, %c0_i32_0 : i32, i32, i32
  }
  func.func @transform_2(%arg0: i32) -> (i32, i32) {
    %c0_i32 = arith.constant 0 : i32
    %c0_i32_0 = arith.constant 0 : i32
    %c0_i32_1 = arith.constant 0 : i32
    return %c0_i32, %c0_i32_0 : i32, i32
  }
  func.func @transform_3(%arg0: i32) -> (i32, i32) {
    %c0_i32 = arith.constant 0 : i32
    %c0_i32_0 = arith.constant 0 : i32
    %c0_i32_1 = arith.constant 0 : i32
    return %c0_i32, %c0_i32_0 : i32, i32
  }
  func.func @transform_4(%arg0: i32) -> (i32, i32) {
    %c0_i32 = arith.constant 0 : i32
    %c0_i32_0 = arith.constant 0 : i32
    %c0_i32_1 = arith.constant 0 : i32
    return %c0_i32, %c0_i32_0 : i32, i32
  }
  func.func @transform_5(%arg0: i32) -> (i32, i32, i32) {
    %c0_i32 = arith.constant 0 : i32
    %c0_i32_0 = arith.constant 0 : i32
    %c0_i32_1 = arith.constant 0 : i32
    return %arg0, %c0_i32, %c0_i32_0 : i32, i32, i32
  }
}

</mosaic_0001>

<llo_original>
// kernel: tpu_custom_call.1
$region0: #{tpu_custom_call.1}
  #allocation0 [shape = 'u32[]', space=smem, size = 0x4, offset = 0x4, fixed_abs, tag = 'smem constant byte address 0x4 - core index']
  #allocation1 [shape = 'u32[144,128]{1,0:T(1,128)}', space=vmem, size = 0x12000, scoped, tag = 'internal scratch']
  %s0 = inlined_call_operand.hbm [shape: f32[2,8,32], index: 0, kind: input, shape index: {}]
  %s1 = inlined_call_operand.hbm [shape: f32[2,8,32], index: 1, kind: input, shape index: {}]
  %s2 = inlined_call_operand.hbm [shape: f32[8,32], index: 2, kind: input, shape index: {}]
  %s3 = inlined_call_operand.vmem [shape: f32[1,32], index: 3, kind: input, shape index: {}]
  %s4 = inlined_call_operand.vmem [shape: f32[1,32], index: 4, kind: input, shape index: {}]
  %s5 = inlined_call_operand.hbm [shape: f32[2,8,32], index: 5, kind: output, shape index: {}]
  %s6 = sld [smem:[#allocation0]]
  $region65: #{tpu_custom_call.1} parent=0
    _
  %s8 = ssub.s32 1, %s6
  %s9 = scalar_select 0, %s8, %s6
  $region1: #{tpu_custom_call.1} parent=0
    #allocation2 [shape = 'u8[8192]{0}', space=vmem, size = 0x2000, scoped, tag = 'input window, operand 0']
    #allocation3 [shape = 's32[2]{0}', space=sflag, size = 0x8, scoped, tag = 'scoped memory for tpu_custom_call.1']
    #allocation4 [shape = 's32[2]{0}', space=sflag, size = 0x8, scoped, tag = 'scoped memory for tpu_custom_call.1']
    #allocation5 [shape = 'u8[8192]{0}', space=vmem, size = 0x2000, scoped, tag = 'input window, operand 1']
    #allocation6 [shape = 's32[2]{0}', space=sflag, size = 0x8, scoped, tag = 'scoped memory for tpu_custom_call.1']
    #allocation7 [shape = 'u8[4096]{0}', space=vmem, size = 0x1000, scoped, tag = 'input window, operand 2, single buffered']
    #allocation8 [shape = 'u8[8192]{0}', space=vmem, size = 0x2000, scoped, tag = 'output window, operand 0']
    %10 = vsyncpa [#allocation3], 0
    %s11 = scalar_lea.sflag [#allocation3], 1
    %12 = vsyncpa %s11, 0
    %13 = vsyncpa [#allocation6], 0
    %s14 = scalar_lea.sflag [#allocation6], 1
    %15 = vsyncpa %s14, 0
    %16 = vsyncpa [#allocation4], 0
    %s17 = scalar_lea.sflag [#allocation4], 1
    %18 = vsyncpa %s17, 0
    loop: start=0, step=1, limit=4
    $region2: #{tpu_custom_call.1} parent=1 // loop_pre_header
      _
    $region3: #{tpu_custom_call.1} parent=1 // loop_header
      %s20 = sphi 0, %s24
      %p21 = scmp.ge.s32.totalorder %s20, 4
      %s30 = sphi 0, %s32
      %s33 = sphi 0, %s30
      %s34 = sphi 0, %s33
      %s50 = sphi 0, %s34
      %s56 = sphi 0, %s58
      %s59 = sphi 0, %s56
      %s60 = sphi 0, %s59
      %s76 = sphi 0, %s60
      %s80 = sphi 0, %s80
      %s82 = sphi 0, %s80
      %s83 = sphi 0, %s82
      %s97 = sphi 0, %s83
      %s101 = sphi 0, %s101
      %s103 = sphi 0, %s101
      %s104 = sphi 0, %s103
      %s118 = sphi 0, %s104
      %s122 = sphi 0, %s122
      %s124 = sphi 0, %s122
      %s125 = sphi 0, %s124
      %s139 = sphi 0, %s125
      %s145 = sphi 0, %s147
      %s148 = sphi 0, %s145
      %s149 = sphi 0, %s148
      %s165 = sphi 0, %s149
    $region4: #{tpu_custom_call.1} parent=1 // loop_header_branch
      %23 = sbr.rel (%p21) target = $region8
    $region5: #{tpu_custom_call.1} parent=1 // loop_body
      %s25 = ssub.s32 %s20, 1
      %s26 = ssub.s32 %s20, 2
      %s27 = sadd.s32 %s20, 1
      %s28 = ssub.s32 %s20, %s27
      %p29 = scmp.eq.s32.totalorder %s28, 0
      %s31 = sadd.s32 %s30, 1
      %s32 = scalar_select %p29, %s30, %s31
      %p35 = pneg %p29
      %p36 = scmp.eq.s32.totalorder %s20, 1
      %p37 = por %p35, %p36
      %p38 = scmp.ne.s32.totalorder %s30, %s33
      %p39 = scmp.eq.s32.totalorder %s20, 0
      %p40 = por %p38, %p39
      %p41 = scmp.ne.s32.totalorder %s30, %s33
      %p42 = scmp.eq.s32.totalorder %s25, 1
      %p43 = por %p41, %p42
      %p44 = scmp.ne.s32.totalorder %s33, %s34
      %p45 = scmp.eq.s32.totalorder %s25, 0
      %p46 = por %p44, %p45
      %p47 = scmp.ne.s32.totalorder %s33, %s34
      %p48 = scmp.eq.s32.totalorder %s26, 1
      %p49 = por %p47, %p48
      %p51 = scmp.ne.s32.totalorder %s34, %s50
      %p52 = scmp.eq.s32.totalorder %s26, 0
      %p53 = por %p51, %p52
      %s54 = ssub.s32 %s20, %s27
      %p55 = scmp.eq.s32.totalorder %s54, 0
      %s57 = sadd.s32 %s56, 1
      %s58 = scalar_select %p55, %s56, %s57
      %p61 = pneg %p55
      %p62 = scmp.eq.s32.totalorder %s20, 1
      %p63 = por %p61, %p62
      %p64 = scmp.ne.s32.totalorder %s56, %s59
      %p65 = scmp.eq.s32.totalorder %s20, 0
      %p66 = por %p64, %p65
      %p67 = scmp.ne.s32.totalorder %s56, %s59
      %p68 = scmp.eq.s32.totalorder %s25, 1
      %p69 = por %p67, %p68
      %p70 = scmp.ne.s32.totalorder %s59, %s60
      %p71 = scmp.eq.s32.totalorder %s25, 0
      %p72 = por %p70, %p71
      %p73 = scmp.ne.s32.totalorder %s59, %s60
      %p74 = scmp.eq.s32.totalorder %s26, 1
      %p75 = por %p73, %p74
      %p77 = scmp.ne.s32.totalorder %s60, %s76
      %p78 = scmp.eq.s32.totalorder %s26, 0
      %p79 = por %p77, %p78
      %s81 = sadd.s32 %s80, 1
      %p84 = scmp.eq.s32.totalorder %s20, 1
      %p85 = scmp.ne.s32.totalorder %s80, %s82
      %p86 = scmp.eq.s32.totalorder %s20, 0
      %p87 = por %p85, %p86
      %p88 = scmp.ne.s32.totalorder %s80, %s82
      %p89 = scmp.eq.s32.totalorder %s25, 1
      %p90 = por %p88, %p89
      %p91 = scmp.ne.s32.totalorder %s82, %s83
      %p92 = scmp.eq.s32.totalorder %s25, 0
      %p93 = por %p91, %p92
      %p94 = scmp.ne.s32.totalorder %s82, %s83
      %p95 = scmp.eq.s32.totalorder %s26, 1
      %p96 = por %p94, %p95
      %p98 = scmp.ne.s32.totalorder %s83, %s97
      %p99 = scmp.eq.s32.totalorder %s26, 0
      %p100 = por %p98, %p99
      %s102 = sadd.s32 %s101, 1
      %p105 = scmp.eq.s32.totalorder %s20, 1
      %p106 = scmp.ne.s32.totalorder %s101, %s103
      %p107 = scmp.eq.s32.totalorder %s20, 0
      %p108 = por %p106, %p107
      %p109 = scmp.ne.s32.totalorder %s101, %s103
      %p110 = scmp.eq.s32.totalorder %s25, 1
      %p111 = por %p109, %p110
      %p112 = scmp.ne.s32.totalorder %s103, %s104
      %p113 = scmp.eq.s32.totalorder %s25, 0
      %p114 = por %p112, %p113
      %p115 = scmp.ne.s32.totalorder %s103, %s104
      %p116 = scmp.eq.s32.totalorder %s26, 1
      %p117 = por %p115, %p116
      %p119 = scmp.ne.s32.totalorder %s104, %s118
      %p120 = scmp.eq.s32.totalorder %s26, 0
      %p121 = por %p119, %p120
      %s123 = sadd.s32 %s122, 1
      %p126 = scmp.eq.s32.totalorder %s20, 1
      %p127 = scmp.ne.s32.totalorder %s122, %s124
      %p128 = scmp.eq.s32.totalorder %s20, 0
      %p129 = por %p127, %p128
      %p130 = scmp.ne.s32.totalorder %s122, %s124
      %p131 = scmp.eq.s32.totalorder %s25, 1
      %p132 = por %p130, %p131
      %p133 = scmp.ne.s32.totalorder %s124, %s125
      %p134 = scmp.eq.s32.totalorder %s25, 0
      %p135 = por %p133, %p134
      %p136 = scmp.ne.s32.totalorder %s124, %s125
      %p137 = scmp.eq.s32.totalorder %s26, 1
      %p138 = por %p136, %p137
      %p140 = scmp.ne.s32.totalorder %s125, %s139
      %p141 = scmp.eq.s32.totalorder %s26, 0
      %p142 = por %p140, %p141
      %s143 = ssub.s32 %s20, %s27
      %p144 = scmp.eq.s32.totalorder %s143, 0
      %s146 = sadd.s32 %s145, 1
      %s147 = scalar_select %p144, %s145, %s146
      %p150 = pneg %p144
      %p151 = scmp.eq.s32.totalorder %s20, 1
      %p152 = por %p150, %p151
      %p153 = scmp.ne.s32.totalorder %s145, %s148
      %p154 = scmp.eq.s32.totalorder %s20, 0
      %p155 = por %p153, %p154
      %p156 = scmp.ne.s32.totalorder %s145, %s148
      %p157 = scmp.eq.s32.totalorder %s25, 1
      %p158 = por %p156, %p157
      %p159 = scmp.ne.s32.totalorder %s148, %s149
      %p160 = scmp.eq.s32.totalorder %s25, 0
      %p161 = por %p159, %p160
      %p162 = scmp.ne.s32.totalorder %s148, %s149
      %p163 = scmp.eq.s32.totalorder %s26, 1
      %p164 = por %p162, %p163
      %p166 = scmp.ne.s32.totalorder %s149, %s165
      %p167 = scmp.eq.s32.totalorder %s26, 0
      %p168 = por %p166, %p167
      %p169 = scmp.le.s32.totalorder 1, %s20
      %p170 = scmp.lt.s32.totalorder %s20, 3
      %p171 = pnand %p169, %p170
      %p172 = pneg %p171
      // Predicated region
      $region9: #{tpu_custom_call.1} parent=5 // pred_check
        _
      $region10: #{tpu_custom_call.1} parent=5 // pred_check_branch
        %174 = sbr.rel (%p171) target = $region12
      $region11: #{tpu_custom_call.1} parent=5 // pred_region
        %s175 = ssub.s32 %s20, 1
        // Predicated region
        $region13: #{tpu_custom_call.1} parent=11 // pred_check
          %p176 = pneg %p93
        $region14: #{tpu_custom_call.1} parent=11 // pred_check_branch
          %178 = sbr.rel (%p176) target = $region16
        $region15: #{tpu_custom_call.1} parent=11 // pred_region
          %s180 = ssub.s32 128, 128
          %181 = vsyncadd [#allocation6], %s180
          %s183 = sshll.u32 [#allocation7], 4
          %s184 = int_to_ptr.vmem [resolvable:$true] %s183
          %186 = dma.hbm_to_vmem [thread:$0]  %s2, 128, %s184, [#allocation6]
        $region16: #{tpu_custom_call.1} parent=11 // pred_fallthru
          _
        // Predicated region
        $region17: #{tpu_custom_call.1} parent=11 // pred_check
          %p187 = pneg %p114
        $region18: #{tpu_custom_call.1} parent=11 // pred_check_branch
          %189 = sbr.rel (%p187) target = $region20
        $region19: #{tpu_custom_call.1} parent=11 // pred_region
          _
        $region20: #{tpu_custom_call.1} parent=11 // pred_fallthru
          _
        // Predicated region
        $region21: #{tpu_custom_call.1} parent=11 // pred_check
          %p190 = pneg %p135
        $region22: #{tpu_custom_call.1} parent=11 // pred_check_branch
          %192 = sbr.rel (%p190) target = $region24
        $region23: #{tpu_custom_call.1} parent=11 // pred_region
          _
        $region24: #{tpu_custom_call.1} parent=11 // pred_fallthru
          _
      $region12: #{tpu_custom_call.1} parent=5 // pred_fallthru
        _
      %p193 = scmp.lt.s32.totalorder %s20, 2
      // Predicated region
      $region25: #{tpu_custom_call.1} parent=5 // pred_check
        %p194 = pneg %p193
      $region26: #{tpu_custom_call.1} parent=5 // pred_check_branch
        %196 = sbr.rel (%p194) target = $region28
      $region27: #{tpu_custom_call.1} parent=5 // pred_region
        // Predicated region
        $region29: #{tpu_custom_call.1} parent=27 // pred_check
          %p197 = pneg %p40
        $region30: #{tpu_custom_call.1} parent=27 // pred_check_branch
          %199 = sbr.rel (%p197) target = $region32
        $region31: #{tpu_custom_call.1} parent=27 // pred_region
          %s200 = sand.u32 %s30, 1
          %s201 = scalar_lea.sflag [#allocation3], %s200
          %s202 = sand.u32 %s30, 1
          %s203 = smul.addr %s202, 8
          %s204 = scalar_lea.vmem [#allocation2], %s203
          %s206 = ssub.s32 128, 128
          %207 = vsyncadd %s201, %s206
          %s208 = smul.addr %s20, 128
          %s209 = scalar_lea.hbm %s0, %s208
          %s211 = sshll.u32 %s204, 4
          %s212 = int_to_ptr.vmem [resolvable:$true] %s211
          %214 = dma.hbm_to_vmem [thread:$0]  %s209, 128, %s212, %s201
        $region32: #{tpu_custom_call.1} parent=27 // pred_fallthru
          _
        // Predicated region
        $region33: #{tpu_custom_call.1} parent=27 // pred_check
          %p215 = pneg %p66
        $region34: #{tpu_custom_call.1} parent=27 // pred_check_branch
          %217 = sbr.rel (%p215) target = $region36
        $region35: #{tpu_custom_call.1} parent=27 // pred_region
          %s218 = sand.u32 %s20, 1
          %s219 = scalar_lea.sflag [#allocation6], %s218
          %s220 = sand.u32 %s56, 1
          %s221 = smul.addr %s220, 8
          %s222 = scalar_lea.vmem [#allocation5], %s221
          %s224 = ssub.s32 128, 128
          %225 = vsyncadd %s219, %s224
          %s226 = smul.addr %s20, 128
          %s227 = scalar_lea.hbm %s1, %s226
          %s229 = sshll.u32 %s222, 4
          %s230 = int_to_ptr.vmem [resolvable:$true] %s229
          %232 = dma.hbm_to_vmem [thread:$0]  %s227, 128, %s230, %s219
        $region36: #{tpu_custom_call.1} parent=27 // pred_fallthru
          _
      $region28: #{tpu_custom_call.1} parent=5 // pred_fallthru
        _
      %p233 = scmp.le.s32.totalorder 1, %s20
      %p234 = scmp.lt.s32.totalorder %s20, 3
      %p235 = pnand %p233, %p234
      %p236 = pneg %p235
      // Predicated region
      $region37: #{tpu_custom_call.1} parent=5 // pred_check
        _
      $region38: #{tpu_custom_call.1} parent=5 // pred_check_branch
        %238 = sbr.rel (%p235) target = $region40
      $region39: #{tpu_custom_call.1} parent=5 // pred_region
        %s239 = ssub.s32 %s20, 1
        %s240 = sand.u32 %s33, 1
        %s241 = scalar_lea.sflag [#allocation3], %s240
        %s242 = sand.u32 %s33, 1
        %s243 = smul.addr %s242, 8
        %s244 = scalar_lea.vmem [#allocation2], %s243
        // Predicated region
        $region41: #{tpu_custom_call.1} parent=39 // pred_check
          %p245 = pneg %p46
        $region42: #{tpu_custom_call.1} parent=39 // pred_check_branch
          %247 = sbr.rel (%p245) target = $region44
        $region43: #{tpu_custom_call.1} parent=39 // pred_region
          %248 = dma.done %s241, 128
        $region44: #{tpu_custom_call.1} parent=39 // pred_fallthru
          _
        %s249 = sand.u32 %s25, 1
        %s250 = scalar_lea.sflag [#allocation6], %s249
        %s251 = sand.u32 %s59, 1
        %s252 = smul.addr %s251, 8
        %s253 = scalar_lea.vmem [#allocation5], %s252
        // Predicated region
        $region45: #{tpu_custom_call.1} parent=39 // pred_check
          %p254 = pneg %p72
        $region46: #{tpu_custom_call.1} parent=39 // pred_check_branch
          %256 = sbr.rel (%p254) target = $region48
        $region47: #{tpu_custom_call.1} parent=39 // pred_region
          %257 = dma.done %s250, 128
        $region48: #{tpu_custom_call.1} parent=39 // pred_fallthru
          _
        // Predicated region
        $region49: #{tpu_custom_call.1} parent=39 // pred_check
          %p258 = pneg %p93
        $region50: #{tpu_custom_call.1} parent=39 // pred_check_branch
          %260 = sbr.rel (%p258) target = $region52
        $region51: #{tpu_custom_call.1} parent=39 // pred_region
          %261 = dma.done [#allocation6], 128
        $region52: #{tpu_custom_call.1} parent=39 // pred_fallthru
          _
        %s262 = sand.u32 %s33, 1
        %s263 = scalar_lea.sflag [#allocation3], %s262
        %s264 = sand.u32 %s33, 1
        %s265 = smul.addr %s264, 8
        %s266 = scalar_lea.vmem [#allocation2], %s265
        %p267 = pneg %p46
        %p268 = pneg %p43
        %s269 = sand.u32 %s25, 1
        %s270 = scalar_lea.sflag [#allocation6], %s269
        %s271 = sand.u32 %s59, 1
        %s272 = smul.addr %s271, 8
        %s273 = scalar_lea.vmem [#allocation5], %s272
        %p274 = pneg %p72
        %p275 = pneg %p69
        %p276 = pneg %p93
        %p277 = pneg %p90
        %p278 = pneg %p114
        %p279 = pneg %p111
        %p280 = pneg %p135
        %p281 = pneg %p132
        %p282 = pneg %p161
        %p283 = pneg %p158
        %s284 = sand.u32 %s148, 1
        %s285 = scalar_lea.sflag [#allocation4], %s284
        %s286 = sand.u32 %s148, 1
        %s287 = smul.addr %s286, 8
        %s288 = scalar_lea.vmem [#allocation8], %s287
        %v289 = vld [vmem:[%s244] sm:$0xff]
        %v290 = vld [vmem:[%s253] sm:$0xff]
        %v291 = vadd.f32 %v289, %v290
        %v292 = vld [vmem:[#allocation7] sm:$0xff]
        %v293 = vadd.f32 %v291, %v292
        %v294 = vld [vmem:[%s3] sm:$0x1]
        %v295 = vld [vmem:[%s4] sm:$0x1]
        %vm296 = vcmask 261120
        %v297 = vsel %vm296, %v293, 0.0
        %298 = vadd.xlane.f32.xlu0 %v297
        %v299 = vpop.xlane.xlu0 %298
        %v300 = vrcp.pop 32.0
        %v301 = vmul.f32 %v299, %v300
        %v302 = vsub.f32 %v293, %v301
        %v303 = vmul.f32 %v302, %v302
        %v304 = vsel %vm296, %v303, 0.0
        %305 = vadd.xlane.f32.xlu0 %v304
        %v306 = vpop.xlane.xlu0 %305
        %v307 = vmul.f32 %v306, %v300
        %v308 = vadd.f32 %v307, 1e-05
        %v309 = vrsqrt.pop %v308
        %v310 = vmul.f32 %v302, %v309
        %v312 = vlaneseq
        %v313 = vshrl.u32 %v312, 7
        %v314 = vsub.s32 0, %v313
        %v315 = vrot.slane %v294, %v314
        %v317 = vmul.f32 %v310, %v315
        %v319 = vlaneseq
        %v320 = vshrl.u32 %v319, 7
        %v321 = vsub.s32 0, %v320
        %v322 = vrot.slane %v295, %v321
        %v324 = vadd.f32 %v317, %v322
        %325 = vst.msk [vmem:[%s288] sm:$0xff] %vm296, %v324
        %s326 = sand.u32 %s148, 1
        %s327 = scalar_lea.sflag [#allocation4], %s326
        %s328 = sand.u32 %s148, 1
        %s329 = smul.addr %s328, 8
        %s330 = scalar_lea.vmem [#allocation8], %s329
        // Predicated region
        $region53: #{tpu_custom_call.1} parent=39 // pred_check
          %p331 = pneg %p158
        $region54: #{tpu_custom_call.1} parent=39 // pred_check_branch
          %333 = sbr.rel (%p331) target = $region56
        $region55: #{tpu_custom_call.1} parent=39 // pred_region
          %s335 = ssub.s32 128, 128
          %336 = vsyncadd %s327, %s335
          %s337 = smul.addr %s25, 128
          %s338 = scalar_lea.hbm %s5, %s337
          %s340 = sshll.u32 %s330, 4
          %s341 = int_to_ptr.vmem [resolvable:$true] %s340
          %343 = dma.vmem_to_hbm [thread:$0]  %s341, 128, %s338, %s327
        $region56: #{tpu_custom_call.1} parent=39 // pred_fallthru
          _
      $region40: #{tpu_custom_call.1} parent=5 // pred_fallthru
        _
      %p344 = scmp.le.s32.totalorder 2, %s20
      // Predicated region
      $region57: #{tpu_custom_call.1} parent=5 // pred_check
        %p345 = pneg %p344
      $region58: #{tpu_custom_call.1} parent=5 // pred_check_branch
        %347 = sbr.rel (%p345) target = $region60
      $region59: #{tpu_custom_call.1} parent=5 // pred_region
        %s348 = ssub.s32 %s20, 2
        // Predicated region
        $region61: #{tpu_custom_call.1} parent=59 // pred_check
          %p349 = pneg %p164
        $region62: #{tpu_custom_call.1} parent=59 // pred_check_branch
          %351 = sbr.rel (%p349) target = $region64
        $region63: #{tpu_custom_call.1} parent=59 // pred_region
          %s352 = sand.u32 %s149, 1
          %s353 = scalar_lea.sflag [#allocation4], %s352
          %s354 = sand.u32 %s149, 1
          %s355 = smul.addr %s354, 8
          %s356 = scalar_lea.vmem [#allocation8], %s355
          %357 = dma.done %s353, 128
        $region64: #{tpu_custom_call.1} parent=59 // pred_fallthru
          _
      $region60: #{tpu_custom_call.1} parent=5 // pred_fallthru
        _
    $region6: #{tpu_custom_call.1} parent=1 // loop_footer
      %s24 = sadd.s32 1, %s20
    $region7: #{tpu_custom_call.1} parent=1 // loop_footer_branch
      %19 = sbr.rel target = $region3
    $region8: #{tpu_custom_call.1} parent=1 // loop_exit
      _
    %358 = vsyncpa [#allocation3], 1
    %s359 = scalar_lea.sflag [#allocation3], 1
    %360 = vsyncpa %s359, 1
    %361 = vsyncpa [#allocation6], 1
    %s362 = scalar_lea.sflag [#allocation6], 1
    %363 = vsyncpa %s362, 1
    %364 = vsyncpa [#allocation4], 1
    %s365 = scalar_lea.sflag [#allocation4], 1
    %366 = vsyncpa %s365, 1

</llo_original>
